<compile_context>
chip_gen: v5e
topology: v5e:2x2
jax: 0.10.0
libtpu: 0.0.40
codegen_flags: <defaults>
</compile_context>

<pallas_src>
import jax
import jax.numpy as jnp
from jax import lax
from jax.experimental import pallas as pl
from jax.experimental.pallas import tpu as pltpu

_SLAB = 16  # sublane height of the feature slab (row 0 = features, row 1 = ones)


def _srgcn_kernel(w_ref, bias_ref, out_deg_ref, adj_ref, h_ref, o_ref):
    B = adj_ref[...]                                  # (Np, Np) bf16, B[src, dst]
    h = h_ref[...]                                    # (SLAB, Np) f32; row0=feat, row1=1

    # D_out^{-1/2}, lane-oriented (computed in the wrapper, fused with the adj pass).
    norm_out = lax.rsqrt(jnp.maximum(out_deg_ref[...], 1.0))         # (1, Np)

    # First mean-aggregation matmul.  Row 1 of the slab is ones, so row 1 of the
    # result is the exact in-degree of every dst node (f32 MXU accumulate) for free.
    agg0 = jnp.dot(h.astype(jnp.bfloat16), B, preferred_element_type=jnp.float32)
    in_deg = agg0[1:2, :]                                             # (1, Np)
    has_in = in_deg > 0.0
    inv_in = jnp.where(has_in, 1.0 / jnp.maximum(in_deg, 1.0), 0.0)   # mean reduce
    # DGL GraphConv norm='both' uses degree.clamp(min=1) ** -0.5
    norm_in = lax.rsqrt(jnp.maximum(in_deg, 1.0))                     # (1, Np)

    def gconv(agg, h_prev, w, bias):
        # graph.update_all(_message, _reduce): message = src['h'], reduce = mean.
        # Zero-in-degree nodes keep their previous value (the UDF reduce skips them).
        h_agg = jnp.where(has_in, agg * inv_in, h_prev)
        # GraphConv(1, 1, norm='both', activation=ReLU):
        #   ReLU( D_in^{-1/2} * (A @ (h * D_out^{-1/2})) * W + b )
        # D_out^{-1/2} folded into the feature lanes (no normalized adjacency copy).
        rst = jnp.dot((h_agg * norm_out).astype(jnp.bfloat16), B,
                      preferred_element_type=jnp.float32)
        return jnp.maximum(rst * (norm_in * w) + bias, 0.0)

    h = gconv(agg0, h, w_ref[0], bias_ref[0])                         # self.first
    agg = jnp.dot(h.astype(jnp.bfloat16), B, preferred_element_type=jnp.float32)
    h = gconv(agg, h, w_ref[1], bias_ref[1])                          # self.second
    agg = jnp.dot(h.astype(jnp.bfloat16), B, preferred_element_type=jnp.float32)
    h = gconv(agg, h, w_ref[2], bias_ref[2])                          # self.third
    o_ref[...] = h


def _srgcn_forward_impl(adj, feat, w, b):
    """adj: (N, N), adj[dst, src]; feat: (N, 1).
    Returns the updated ndata['feat'] of shape (N, 1)."""
    N = adj.shape[0]
    Np = ((N + 127) // 128) * 128
    pad = Np - N

    # One fused wrapper pass over adj (under jit): transpose to (src, dst), cast to
    # bf16, zero-pad, plus the lane-oriented out-degree reduction over the same input.
    # For repeated inference on a static graph, hoist/cache B and out_deg_row.
    B = jnp.pad(adj.T.astype(jnp.bfloat16), ((0, pad), (0, pad)))
    out_deg_row = jnp.pad(jnp.sum(adj.astype(jnp.float32), axis=0), (0, pad))[None, :]

    feat_row = jnp.pad(feat[:, 0].astype(jnp.float32), (0, pad))[None, :]
    H = jnp.concatenate(
        [feat_row,                                    # row 0: real feature channel
         jnp.ones((1, Np), jnp.float32),              # row 1: ones -> in-degree row
         jnp.zeros((_SLAB - 2, Np), jnp.float32)],    # rest: padding sublanes
        axis=0)

    # Scoped VMEM: one bf16 adjacency (only O(Np^2) resident) + a handful of
    # (SLAB, Np)/(1, Np) f32 vectors, with headroom; capped at 85% of physical VMEM
    # (generation-aware: ~54 MiB on v7x, ~109 MiB on v5e/v6e).
    adj_bytes = Np * Np * 2
    vec_bytes = 8 * _SLAB * Np * 4
    try:
        phys_vmem = int(pltpu.get_tpu_info().vmem_capacity_bytes)
    except Exception:  # conservative fallback: v7x has the smallest VMEM (64 MiB)
        phys_vmem = 64 * 1024 * 1024
    cap = int(phys_vmem * 0.85)
    vmem_limit = int(min(cap, max(4 * 1024 * 1024, 1.35 * (adj_bytes + vec_bytes))))

    out = pl.pallas_call(
        _srgcn_kernel,
        out_shape=jax.ShapeDtypeStruct((_SLAB, Np), jnp.float32),
        in_specs=[
            pl.BlockSpec(memory_space=pltpu.MemorySpace.SMEM),   # w (3,)
            pl.BlockSpec(memory_space=pltpu.MemorySpace.SMEM),   # b (3,)
            pl.BlockSpec(memory_space=pltpu.MemorySpace.VMEM),   # out_deg (1, Np) f32
            pl.BlockSpec(memory_space=pltpu.MemorySpace.VMEM),   # B (Np, Np) bf16
            pl.BlockSpec(memory_space=pltpu.MemorySpace.VMEM),   # H (SLAB, Np) f32
        ],
        out_specs=pl.BlockSpec(memory_space=pltpu.MemorySpace.VMEM),
        compiler_params=pltpu.CompilerParams(vmem_limit_bytes=vmem_limit),
    )(w.astype(jnp.float32), b.astype(jnp.float32), out_deg_row, B, H)

    return out[0, :N][:, None]


srgcn_forward = jax.jit(_srgcn_forward_impl)


def _srgcn_ref(adj, feat, w, b):
    """Pure-JAX f32 reference of the same forward pass (for verification)."""
    A = adj.astype(jnp.float32)
    h = feat.astype(jnp.float32)
    in_deg = A.sum(axis=1, keepdims=True)
    out_deg = A.sum(axis=0)[:, None]
    has_in = in_deg > 0
    inv_in = jnp.where(has_in, 1.0 / jnp.maximum(in_deg, 1.0), 0.0)
    norm_in = 1.0 / jnp.sqrt(jnp.maximum(in_deg, 1.0))
    norm_out = 1.0 / jnp.sqrt(jnp.maximum(out_deg, 1.0))
    for i in range(3):
        agg = A @ h
        h = jnp.where(has_in, agg * inv_in, h)
        rst = (A @ (h * norm_out)) * norm_in * w[i] + b[i]
        h = jnp.maximum(rst, 0.0)
    return h


if __name__ == "__main__":
    key = jax.random.PRNGKey(0)
    k_adj, k_feat = jax.random.split(key)

    N = 16  # number of graph nodes (the `channels` ctor arg of SRGCN is unused in forward)
    # Random directed graph + self-loops (GraphConv expects nonzero in-degree).
    adj = jax.random.bernoulli(k_adj, p=0.3, shape=(N, N)).astype(jnp.float32)
    adj = jnp.maximum(adj, jnp.eye(N, dtype=jnp.float32))
    feat = jax.random.normal(k_feat, (N, 1), dtype=jnp.float32)

    # Deterministic GraphConv(1,1) parameters (1x1 weight -> scalar, scalar bias),
    # one (w, b) pair per layer: first, second, third.
    w = jnp.array([0.9, -0.7, 1.2], dtype=jnp.float32)
    b = jnp.array([0.1, 0.05, -0.02], dtype=jnp.float32)

    out = srgcn_forward(adj, feat, w, b)
    out = jax.block_until_ready(out)

    ref = _srgcn_ref(adj, feat, w, b)
    assert out.shape == (N, 1)
    # bf16 matmul inputs (adjacency + scaled h casts) => loosen tolerance vs f32 ref.
    assert jnp.allclose(out, ref, rtol=2e-2, atol=2e-2), "mismatch vs reference"

    print("KERNEL_OK")
</pallas_src>

<mosaic_0001>
module attributes {stable_mosaic.version = 11 : i64} {
  func.func @_srgcn_kernel(%arg0: memref<3xf32, #tpu.memory_space<smem>>, %arg1: memref<3xf32, #tpu.memory_space<smem>>, %arg2: memref<1x128xf32, #tpu.memory_space<vmem>>, %arg3: memref<128x128xbf16, #tpu.memory_space<vmem>>, %arg4: memref<16x128xf32, #tpu.memory_space<vmem>>, %arg5: memref<16x128xf32, #tpu.memory_space<vmem>>) attributes {dimension_semantics = [], scalar_prefetch = 0 : i64, scratch_operands = 0 : i64, tpu.core_type = #tpu.core_type<tc>} {
    %c0 = arith.constant 0 : index
    %c0_0 = arith.constant 0 : index
    %0 = vector.load %arg3[%c0, %c0_0] : memref<128x128xbf16, #tpu.memory_space<vmem>>, vector<128x128xbf16>
    %c0_1 = arith.constant 0 : index
    %c0_2 = arith.constant 0 : index
    %1 = vector.load %arg4[%c0_1, %c0_2] : memref<16x128xf32, #tpu.memory_space<vmem>>, vector<16x128xf32>
    %c0_3 = arith.constant 0 : index
    %c0_4 = arith.constant 0 : index
    %2 = vector.load %arg2[%c0_3, %c0_4] : memref<1x128xf32, #tpu.memory_space<vmem>>, vector<1x128xf32>
    %cst = arith.constant 1.000000e+00 : f32
    %3 = vector.broadcast %cst : f32 to vector<1x128xf32>
    %4 = arith.maximumf %2, %3 : vector<1x128xf32>
    %5 = math.rsqrt %4 : vector<1x128xf32>
    %6 = arith.truncf %1 : vector<16x128xf32> to vector<16x128xbf16>
    %cst_5 = arith.constant dense<0.000000e+00> : vector<16x128xf32>
    %7 = tpu.matmul %6, %0, %cst_5 {dimension_numbers = #tpu.dot_dimension_numbers<[1], [0], [0], [1], [0, 0, 1, 1], [], []>} : vector<16x128xbf16>, vector<128x128xbf16>, vector<16x128xf32> -> vector<16x128xf32>
    %8 = vector.extract_strided_slice %7 {offsets = [1, 0], sizes = [1, 128], strides = [1, 1]} : vector<16x128xf32> to vector<1x128xf32>
    %cst_6 = arith.constant 0.000000e+00 : f32
    %9 = vector.broadcast %cst_6 : f32 to vector<1x128xf32>
    %10 = arith.cmpf ogt, %8, %9 : vector<1x128xf32>
    %cst_7 = arith.constant 1.000000e+00 : f32
    %11 = vector.broadcast %cst_7 : f32 to vector<1x128xf32>
    %12 = arith.maximumf %8, %11 : vector<1x128xf32>
    %cst_8 = arith.constant 1.000000e+00 : f32
    %13 = vector.broadcast %cst_8 : f32 to vector<1x128xf32>
    %14 = arith.divf %13, %12 : vector<1x128xf32>
    %cst_9 = arith.constant 0.000000e+00 : f32
    %15 = vector.broadcast %cst_9 : f32 to vector<1x128xf32>
    %16 = arith.select %10, %14, %15 : vector<1x128xi1>, vector<1x128xf32>
    %cst_10 = arith.constant 1.000000e+00 : f32
    %17 = vector.broadcast %cst_10 : f32 to vector<1x128xf32>
    %18 = arith.maximumf %8, %17 : vector<1x128xf32>
    %19 = math.rsqrt %18 : vector<1x128xf32>
    %c0_11 = arith.constant 0 : index
    %20 = memref.load %arg0[%c0_11] : memref<3xf32, #tpu.memory_space<smem>>
    %c0_12 = arith.constant 0 : index
    %21 = memref.load %arg1[%c0_12] : memref<3xf32, #tpu.memory_space<smem>>
    %22 = vector.broadcast %16 : vector<1x128xf32> to vector<16x128xf32>
    %23 = arith.mulf %7, %22 : vector<16x128xf32>
    %24 = vector.shape_cast %10 : vector<1x128xi1> to vector<1x128xi1>
    %25 = vector.broadcast %24 : vector<1x128xi1> to vector<16x128xi1>
    %26 = arith.select %25, %23, %1 : vector<16x128xi1>, vector<16x128xf32>
    %27 = vector.broadcast %5 : vector<1x128xf32> to vector<16x128xf32>
    %28 = arith.mulf %26, %27 : vector<16x128xf32>
    %29 = arith.truncf %28 : vector<16x128xf32> to vector<16x128xbf16>
    %cst_13 = arith.constant dense<0.000000e+00> : vector<16x128xf32>
    %30 = tpu.matmul %29, %0, %cst_13 {dimension_numbers = #tpu.dot_dimension_numbers<[1], [0], [0], [1], [0, 0, 1, 1], [], []>} : vector<16x128xbf16>, vector<128x128xbf16>, vector<16x128xf32> -> vector<16x128xf32>
    %31 = vector.broadcast %20 : f32 to vector<1x128xf32>
    %32 = arith.mulf %19, %31 : vector<1x128xf32>
    %33 = vector.broadcast %32 : vector<1x128xf32> to vector<16x128xf32>
    %34 = arith.mulf %30, %33 : vector<16x128xf32>
    %35 = vector.broadcast %21 : f32 to vector<16x128xf32>
    %36 = arith.addf %34, %35 : vector<16x128xf32>
    %cst_14 = arith.constant 0.000000e+00 : f32
    %37 = vector.broadcast %cst_14 : f32 to vector<16x128xf32>
    %38 = arith.maximumf %36, %37 : vector<16x128xf32>
    %39 = arith.truncf %38 : vector<16x128xf32> to vector<16x128xbf16>
    %cst_15 = arith.constant dense<0.000000e+00> : vector<16x128xf32>
    %40 = tpu.matmul %39, %0, %cst_15 {dimension_numbers = #tpu.dot_dimension_numbers<[1], [0], [0], [1], [0, 0, 1, 1], [], []>} : vector<16x128xbf16>, vector<128x128xbf16>, vector<16x128xf32> -> vector<16x128xf32>
    %c1 = arith.constant 1 : index
    %41 = memref.load %arg0[%c1] : memref<3xf32, #tpu.memory_space<smem>>
    %c1_16 = arith.constant 1 : index
    %42 = memref.load %arg1[%c1_16] : memref<3xf32, #tpu.memory_space<smem>>
    %43 = vector.broadcast %16 : vector<1x128xf32> to vector<16x128xf32>
    %44 = arith.mulf %40, %43 : vector<16x128xf32>
    %45 = vector.shape_cast %10 : vector<1x128xi1> to vector<1x128xi1>
    %46 = vector.broadcast %45 : vector<1x128xi1> to vector<16x128xi1>
    %47 = arith.select %46, %44, %38 : vector<16x128xi1>, vector<16x128xf32>
    %48 = vector.broadcast %5 : vector<1x128xf32> to vector<16x128xf32>
    %49 = arith.mulf %47, %48 : vector<16x128xf32>
    %50 = arith.truncf %49 : vector<16x128xf32> to vector<16x128xbf16>
    %cst_17 = arith.constant dense<0.000000e+00> : vector<16x128xf32>
    %51 = tpu.matmul %50, %0, %cst_17 {dimension_numbers = #tpu.dot_dimension_numbers<[1], [0], [0], [1], [0, 0, 1, 1], [], []>} : vector<16x128xbf16>, vector<128x128xbf16>, vector<16x128xf32> -> vector<16x128xf32>
    %52 = vector.broadcast %41 : f32 to vector<1x128xf32>
    %53 = arith.mulf %19, %52 : vector<1x128xf32>
    %54 = vector.broadcast %53 : vector<1x128xf32> to vector<16x128xf32>
    %55 = arith.mulf %51, %54 : vector<16x128xf32>
    %56 = vector.broadcast %42 : f32 to vector<16x128xf32>
    %57 = arith.addf %55, %56 : vector<16x128xf32>
    %cst_18 = arith.constant 0.000000e+00 : f32
    %58 = vector.broadcast %cst_18 : f32 to vector<16x128xf32>
    %59 = arith.maximumf %57, %58 : vector<16x128xf32>
    %60 = arith.truncf %59 : vector<16x128xf32> to vector<16x128xbf16>
    %cst_19 = arith.constant dense<0.000000e+00> : vector<16x128xf32>
    %61 = tpu.matmul %60, %0, %cst_19 {dimension_numbers = #tpu.dot_dimension_numbers<[1], [0], [0], [1], [0, 0, 1, 1], [], []>} : vector<16x128xbf16>, vector<128x128xbf16>, vector<16x128xf32> -> vector<16x128xf32>
    %c2 = arith.constant 2 : index
    %62 = memref.load %arg0[%c2] : memref<3xf32, #tpu.memory_space<smem>>
    %c2_20 = arith.constant 2 : index
    %63 = memref.load %arg1[%c2_20] : memref<3xf32, #tpu.memory_space<smem>>
    %64 = vector.broadcast %16 : vector<1x128xf32> to vector<16x128xf32>
    %65 = arith.mulf %61, %64 : vector<16x128xf32>
    %66 = vector.shape_cast %10 : vector<1x128xi1> to vector<1x128xi1>
    %67 = vector.broadcast %66 : vector<1x128xi1> to vector<16x128xi1>
    %68 = arith.select %67, %65, %59 : vector<16x128xi1>, vector<16x128xf32>
    %69 = vector.broadcast %5 : vector<1x128xf32> to vector<16x128xf32>
    %70 = arith.mulf %68, %69 : vector<16x128xf32>
    %71 = arith.truncf %70 : vector<16x128xf32> to vector<16x128xbf16>
    %cst_21 = arith.constant dense<0.000000e+00> : vector<16x128xf32>
    %72 = tpu.matmul %71, %0, %cst_21 {dimension_numbers = #tpu.dot_dimension_numbers<[1], [0], [0], [1], [0, 0, 1, 1], [], []>} : vector<16x128xbf16>, vector<128x128xbf16>, vector<16x128xf32> -> vector<16x128xf32>
    %73 = vector.broadcast %62 : f32 to vector<1x128xf32>
    %74 = arith.mulf %19, %73 : vector<1x128xf32>
    %75 = vector.broadcast %74 : vector<1x128xf32> to vector<16x128xf32>
    %76 = arith.mulf %72, %75 : vector<16x128xf32>
    %77 = vector.broadcast %63 : f32 to vector<16x128xf32>
    %78 = arith.addf %76, %77 : vector<16x128xf32>
    %cst_22 = arith.constant 0.000000e+00 : f32
    %79 = vector.broadcast %cst_22 : f32 to vector<16x128xf32>
    %80 = arith.maximumf %78, %79 : vector<16x128xf32>
    %c0_23 = arith.constant 0 : index
    %c0_24 = arith.constant 0 : index
    %81 = vector.load %arg5[%c0_23, %c0_24] : memref<16x128xf32, #tpu.memory_space<vmem>>, vector<16x128xf32>
    tpu.vector_store %arg5[%c0_23, %c0_24], %80 {strides = array<i32>} : memref<16x128xf32, #tpu.memory_space<vmem>>, vector<16x128xf32>,
    return
  }
}

</mosaic_0001>

<llo_original>
// kernel: _srgcn_forward_impl.1
$region0: #{_srgcn_forward_impl.1}
  #allocation0 [shape = 'u32[]', space=smem, size = 0x4, offset = 0x4, fixed_abs, tag = 'smem constant byte address 0x4 - core index']
  #allocation1 [shape = 'u32[72,128]{1,0:T(1,128)}', space=vmem, size = 0x9000, scoped, tag = 'internal scratch']
  %s0 = inlined_call_operand.vmem [shape: f32[3], index: 0, kind: input, shape index: {}]
  %s1 = inlined_call_operand.vmem [shape: f32[3], index: 1, kind: input, shape index: {}]
  %s2 = inlined_call_operand.vmem [shape: f32[1,128], index: 2, kind: input, shape index: {}]
  %s3 = inlined_call_operand.vmem [shape: bf16[128,128], index: 3, kind: input, shape index: {}]
  %s4 = inlined_call_operand.vmem [shape: f32[16,128], index: 4, kind: input, shape index: {}]
  %s5 = inlined_call_operand.vmem [shape: f32[16,128], index: 5, kind: output, shape index: {}]
  %s6 = sld [smem:[#allocation0]]
  $region38: #{_srgcn_forward_impl.1} parent=0
    _
  %s8 = ssub.s32 1, %s6
  %s9 = scalar_select 0, %s8, %s6
  $region1: #{_srgcn_forward_impl.1} parent=0
    #allocation2 [shape = 'u8[512]{0}', space=smem, size = 0x200, scoped, tag = 'input window, operand 0, single buffered']
    #allocation3 [shape = 's32[1]{0}', space=sflag, size = 0x4, scoped, tag = 'scoped memory for _srgcn_forward_impl.1']
    #allocation4 [shape = 'u8[512]{0}', space=smem, size = 0x200, scoped, tag = 'input window, operand 1, single buffered']
    #allocation5 [shape = 's32[1]{0}', space=sflag, size = 0x4, scoped, tag = 'scoped memory for _srgcn_forward_impl.1']
    %10 = vsyncpa [#allocation3], 0
    %11 = vsyncpa [#allocation5], 0
    // Predicated region
    $region2: #{_srgcn_forward_impl.1} parent=1 // pred_check
      _
    $region3: #{_srgcn_forward_impl.1} parent=1 // pred_check_branch
      %13 = sbr.rel (0) target = $region5
    $region4: #{_srgcn_forward_impl.1} parent=1 // pred_region
      %15 = vsyncadd [#allocation3], 0
      %s17 = sshll.u32 %s0, 4
      %s18 = int_to_ptr.vmem [resolvable:$true] %s17
      %20 = dma.vmem_to_smem %s18, 16, [#allocation2], [#allocation3]
    $region5: #{_srgcn_forward_impl.1} parent=1 // pred_fallthru
      _
    // Predicated region
    $region6: #{_srgcn_forward_impl.1} parent=1 // pred_check
      _
    $region7: #{_srgcn_forward_impl.1} parent=1 // pred_check_branch
      %22 = sbr.rel (0) target = $region9
    $region8: #{_srgcn_forward_impl.1} parent=1 // pred_region
      %24 = vsyncadd [#allocation5], 0
      %s26 = sshll.u32 %s1, 4
      %s27 = int_to_ptr.vmem [resolvable:$true] %s26
      %29 = dma.vmem_to_smem %s27, 16, [#allocation4], [#allocation5]
    $region9: #{_srgcn_forward_impl.1} parent=1 // pred_fallthru
      _
    // Predicated region
    $region10: #{_srgcn_forward_impl.1} parent=1 // pred_check
      _
    $region11: #{_srgcn_forward_impl.1} parent=1 // pred_check_branch
      %31 = sbr.rel (0) target = $region13
    $region12: #{_srgcn_forward_impl.1} parent=1 // pred_region
      _
    $region13: #{_srgcn_forward_impl.1} parent=1 // pred_fallthru
      _
    // Predicated region
    $region14: #{_srgcn_forward_impl.1} parent=1 // pred_check
      _
    $region15: #{_srgcn_forward_impl.1} parent=1 // pred_check_branch
      %33 = sbr.rel (0) target = $region17
    $region16: #{_srgcn_forward_impl.1} parent=1 // pred_region
      _
    $region17: #{_srgcn_forward_impl.1} parent=1 // pred_fallthru
      _
    // Predicated region
    $region18: #{_srgcn_forward_impl.1} parent=1 // pred_check
      _
    $region19: #{_srgcn_forward_impl.1} parent=1 // pred_check_branch
      %35 = sbr.rel (0) target = $region21
    $region20: #{_srgcn_forward_impl.1} parent=1 // pred_region
      _
    $region21: #{_srgcn_forward_impl.1} parent=1 // pred_fallthru
      _
    // Predicated region
    $region22: #{_srgcn_forward_impl.1} parent=1 // pred_check
      _
    $region23: #{_srgcn_forward_impl.1} parent=1 // pred_check_branch
      %37 = sbr.rel (0) target = $region25
    $region24: #{_srgcn_forward_impl.1} parent=1 // pred_region
      %39 = dma.done [#allocation3], 16
    $region25: #{_srgcn_forward_impl.1} parent=1 // pred_fallthru
      _
    // Predicated region
    $region26: #{_srgcn_forward_impl.1} parent=1 // pred_check
      _
    $region27: #{_srgcn_forward_impl.1} parent=1 // pred_check_branch
      %41 = sbr.rel (0) target = $region29
    $region28: #{_srgcn_forward_impl.1} parent=1 // pred_region
      %43 = dma.done [#allocation5], 16
    $region29: #{_srgcn_forward_impl.1} parent=1 // pred_fallthru
      _
    %44 = sfence
    %v45 = vld [vmem:[%s3] sm:$0xf]
    %v46 = vld [vmem:[%s3 + $0x4] sm:$0xf]
    %v47 = vld [vmem:[%s3 + $0x8] sm:$0xf]
    %v48 = vld [vmem:[%s3 + $0xc] sm:$0xf]
    %v49 = vld [vmem:[%s3 + $0x10] sm:$0xf]
    %v50 = vld [vmem:[%s3 + $0x14] sm:$0xf]
    %v51 = vld [vmem:[%s3 + $0x18] sm:$0xf]
    %v52 = vld [vmem:[%s3 + $0x1c] sm:$0xf]
    %v53 = vld [vmem:[%s3 + $0x20] sm:$0xf]
    %v54 = vld [vmem:[%s3 + $0x24] sm:$0xf]
    %v55 = vld [vmem:[%s3 + $0x28] sm:$0xf]
    %v56 = vld [vmem:[%s3 + $0x2c] sm:$0xf]
    %v57 = vld [vmem:[%s3 + $0x30] sm:$0xf]
    %v58 = vld [vmem:[%s3 + $0x34] sm:$0xf]
    %v59 = vld [vmem:[%s3 + $0x38] sm:$0xf]
    %v60 = vld [vmem:[%s3 + $0x3c] sm:$0xf]
    %v61 = vld [vmem:[%s4] sm:$0xff]
    %v62 = vld [vmem:[%s4 + $0x8] sm:$0xff]
    %v63 = vld [vmem:[%s2] sm:$0x1]
    %v64 = vmax.f32 %v63, 1.0
    %v65 = vrsqrt.pop %v64
    %v66 = vmul.f32 %v65, %v64
    %v67 = vmul.f32 %v66, %v65
    %v68 = vmul.f32 0.5, %v67
    %v69 = vsub.f32 1.5, %v68
    %v70 = vmul.f32 %v65, %v69
    %vm71 = vweird.f32 %v64
    %vm72 = vweird.f32 %v65
    %vm73 = vmor %vm71, %vm72
    %v74 = vsel %vm73, %v65, %v70
    %v75 = vpack.c.bf16 %v62, %v61
    %v92 = vunpack.c.l.b16 %v45
    %v93 = vunpack.c.l.b16 %v46
    %v94 = vunpack.c.l.b16 %v47
    %v95 = vunpack.c.l.b16 %v48
    %v96 = vunpack.c.l.b16 %v49
    %v97 = vunpack.c.l.b16 %v50
    %v98 = vunpack.c.l.b16 %v51
    %v99 = vunpack.c.l.b16 %v52
    %v100 = vunpack.c.l.b16 %v53
    %v101 = vunpack.c.l.b16 %v54
    %v102 = vunpack.c.l.b16 %v55
    %v103 = vunpack.c.l.b16 %v56
    %v104 = vunpack.c.l.b16 %v57
    %v105 = vunpack.c.l.b16 %v58
    %v106 = vunpack.c.l.b16 %v59
    %v107 = vunpack.c.l.b16 %v60
    %v108 = vpack.c.b16 %v93, %v92
    %v109 = vpack.c.b16 %v95, %v94
    %v110 = vpack.c.b16 %v97, %v96
    %v111 = vpack.c.b16 %v99, %v98
    %v112 = vpack.c.b16 %v101, %v100
    %v113 = vpack.c.b16 %v103, %v102
    %v114 = vpack.c.b16 %v105, %v104
    %v115 = vpack.c.b16 %v107, %v106
    %124 = vmatpush.bf16.msra.mxu0 %v115
    %125 = vmatpush.bf16.msra.mxu0 %v114
    %126 = vmatpush.bf16.msra.mxu0 %v113
    %127 = vmatpush.bf16.msra.mxu0 %v112
    %128 = vmatpush.bf16.msra.mxu0 %v111
    %129 = vmatpush.bf16.msra.mxu0 %v110
    %130 = vmatpush.bf16.msra.mxu0 %v109
    %131 = vmatpush.bf16.msra.mxu0 %v108
    %132 = vmatmul.bf16.gmra.mxu0 %v75
    %v133 = vpop.f32.mrf.mxu0
    %v134 = vadd.f32 0.0, %v133
    %v135 = vpop.f32.mrf.mxu0
    %v136 = vadd.f32 0.0, %v135
    %137 = vdwg.mxu0
    %vm138 = vcmp.gt.f32.partialorder %v134, 0.0
    %v139 = vmax.f32 %v134, 1.0
    %v140 = vrcp.pop %v139
    %v141 = vmul.f32 %v139, %v140
    %v142 = vsub.f32 1.0, %v141
    %v143 = vmul.f32 %v140, %v142
    %v144 = vadd.f32 %v140, %v143
    %vm145 = vweird.f32 %v139
    %vm146 = vweird.f32 %v140
    %vm147 = vmor %vm145, %vm146
    %v148 = vsel %vm147, %v140, %v144
    %v149 = vand.u32 2147483647, %v139
    %vm150 = vcmp.eq.f32.partialorder %v149, 8.507059e+37
    %v151 = vand.u32 %v139, 2147483648
    %v152 = vor.u32 1.1754944e-38, %v151
    %v153 = vsel %vm150, %v152, %v148
    %v154 = vmul.f32 1.0, %v153
    %v155 = vsel %vm138, %v154, 0.0
    %v156 = vrsqrt.pop %v139
    %v157 = vmul.f32 %v156, %v139
    %v158 = vmul.f32 %v157, %v156
    %v159 = vmul.f32 0.5, %v158
    %v160 = vsub.f32 1.5, %v159
    %v161 = vmul.f32 %v156, %v160
    %vm162 = vweird.f32 %v139
    %vm163 = vweird.f32 %v156
    %vm164 = vmor %vm162, %vm163
    %v165 = vsel %vm164, %v156, %v161
    %s166 = sld [smem:[#allocation2]]
    %s167 = sld [smem:[#allocation4]]
    %v168 = vperm.slane %v155, 1
    %v169 = vmul.f32 %v134, %v168
    %v170 = vmul.f32 %v136, %v168
    %v171 = vsel %vm138, 1, 0
    %v172 = vperm.slane %v171, 1
    %vm173 = vcmp.eq.s32.totalorder %v172, 1
    %v174 = vsel %vm173, %v169, %v61
    %v175 = vsel %vm173, %v170, %v62
    %v177 = vperm.slane %v74, 0
    %v179 = vmul.f32 %v174, %v177
    %v180 = vmul.f32 %v175, %v177
    %v181 = vpack.c.bf16 %v180, %v179
    %182 = vmatpush.bf16.msra.mxu0 %v115
    %183 = vmatpush.bf16.msra.mxu0 %v114
    %184 = vmatpush.bf16.msra.mxu0 %v113
    %185 = vmatpush.bf16.msra.mxu0 %v112
    %186 = vmatpush.bf16.msra.mxu0 %v111
    %187 = vmatpush.bf16.msra.mxu0 %v110
    %188 = vmatpush.bf16.msra.mxu0 %v109
    %189 = vmatpush.bf16.msra.mxu0 %v108
    %190 = vmatmul.bf16.gmra.mxu0 %v181
    %v191 = vpop.f32.mrf.mxu0
    %v192 = vadd.f32 0.0, %v191
    %v193 = vpop.f32.mrf.mxu0
    %v194 = vadd.f32 0.0, %v193
    %195 = vdwg.mxu0
    %v196 = vstv %s166
    %v197 = vmul.f32 %v165, %v196
    %v198 = vperm.slane %v197, 1
    %v199 = vmul.f32 %v192, %v198
    %v200 = vmul.f32 %v194, %v198
    %v201 = vstv %s167
    %v202 = vadd.f32 %v199, %v201
    %v203 = vadd.f32 %v200, %v201
    %v204 = vmax.f32 %v202, 0.0
    %v205 = vmax.f32 %v203, 0.0
    %v206 = vpack.c.bf16 %v205, %v204
    %207 = vmatpush.bf16.msra.mxu0 %v115
    %208 = vmatpush.bf16.msra.mxu0 %v114
    %209 = vmatpush.bf16.msra.mxu0 %v113
    %210 = vmatpush.bf16.msra.mxu0 %v112
    %211 = vmatpush.bf16.msra.mxu0 %v111
    %212 = vmatpush.bf16.msra.mxu0 %v110
    %213 = vmatpush.bf16.msra.mxu0 %v109
    %214 = vmatpush.bf16.msra.mxu0 %v108
    %215 = vmatmul.bf16.gmra.mxu0 %v206
    %v216 = vpop.f32.mrf.mxu0
    %v217 = vadd.f32 0.0, %v216
    %v218 = vpop.f32.mrf.mxu0
    %v219 = vadd.f32 0.0, %v218
    %220 = vdwg.mxu0
    %s221 = sld [smem:[#allocation2 + $0x1]]
    %s222 = sld [smem:[#allocation4 + $0x1]]
    %v223 = vmul.f32 %v217, %v168
    %v224 = vmul.f32 %v219, %v168
    %v225 = vsel %vm173, %v223, %v204
    %v226 = vsel %vm173, %v224, %v205
    %v227 = vmul.f32 %v225, %v177
    %v228 = vmul.f32 %v226, %v177
    %v229 = vpack.c.bf16 %v228, %v227
    %230 = vmatpush.bf16.msra.mxu0 %v115
    %231 = vmatpush.bf16.msra.mxu0 %v114
    %232 = vmatpush.bf16.msra.mxu0 %v113
    %233 = vmatpush.bf16.msra.mxu0 %v112
    %234 = vmatpush.bf16.msra.mxu0 %v111
    %235 = vmatpush.bf16.msra.mxu0 %v110
    %236 = vmatpush.bf16.msra.mxu0 %v109
    %237 = vmatpush.bf16.msra.mxu0 %v108
    %238 = vmatmul.bf16.gmra.mxu0 %v229
    %v239 = vpop.f32.mrf.mxu0
    %v240 = vadd.f32 0.0, %v239
    %v241 = vpop.f32.mrf.mxu0
    %v242 = vadd.f32 0.0, %v241
    %243 = vdwg.mxu0
    %v244 = vstv %s221
    %v245 = vmul.f32 %v165, %v244
    %v246 = vperm.slane %v245, 1
    %v247 = vmul.f32 %v240, %v246
    %v248 = vmul.f32 %v242, %v246
    %v249 = vstv %s222
    %v250 = vadd.f32 %v247, %v249
    %v251 = vadd.f32 %v248, %v249
    %v252 = vmax.f32 %v250, 0.0
    %v253 = vmax.f32 %v251, 0.0
    %v254 = vpack.c.bf16 %v253, %v252
    %255 = vmatpush.bf16.msra.mxu0 %v115
    %256 = vmatpush.bf16.msra.mxu0 %v114
    %257 = vmatpush.bf16.msra.mxu0 %v113
    %258 = vmatpush.bf16.msra.mxu0 %v112
    %259 = vmatpush.bf16.msra.mxu0 %v111
    %260 = vmatpush.bf16.msra.mxu0 %v110
    %261 = vmatpush.bf16.msra.mxu0 %v109
    %262 = vmatpush.bf16.msra.mxu0 %v108
    %263 = vmatmul.bf16.gmra.mxu0 %v254
    %v264 = vpop.f32.mrf.mxu0
    %v265 = vadd.f32 0.0, %v264
    %v266 = vpop.f32.mrf.mxu0
    %v267 = vadd.f32 0.0, %v266
    %268 = vdwg.mxu0
    %s269 = sld [smem:[#allocation2 + $0x2]]
    %s270 = sld [smem:[#allocation4 + $0x2]]
    %v271 = vmul.f32 %v265, %v168
    %v272 = vmul.f32 %v267, %v168
    %v273 = vsel %vm173, %v271, %v252
    %v274 = vsel %vm173, %v272, %v253
    %v275 = vmul.f32 %v273, %v177
    %v276 = vmul.f32 %v274, %v177
    %v277 = vpack.c.bf16 %v276, %v275
    %278 = vmatpush.bf16.msra.mxu0 %v115
    %279 = vmatpush.bf16.msra.mxu0 %v114
    %280 = vmatpush.bf16.msra.mxu0 %v113
    %281 = vmatpush.bf16.msra.mxu0 %v112
    %282 = vmatpush.bf16.msra.mxu0 %v111
    %283 = vmatpush.bf16.msra.mxu0 %v110
    %284 = vmatpush.bf16.msra.mxu0 %v109
    %285 = vmatpush.bf16.msra.mxu0 %v108
    %286 = vmatmul.bf16.gmra.mxu0 %v277
    %v287 = vpop.f32.mrf.mxu0
    %v288 = vadd.f32 0.0, %v287
    %v289 = vpop.f32.mrf.mxu0
    %v290 = vadd.f32 0.0, %v289
    %291 = vdwg.mxu0
    %v292 = vstv %s269
    %v293 = vmul.f32 %v165, %v292
    %v294 = vperm.slane %v293, 1
    %v295 = vmul.f32 %v288, %v294
    %v296 = vmul.f32 %v290, %v294
    %v297 = vstv %s270
    %v298 = vadd.f32 %v295, %v297
    %v299 = vadd.f32 %v296, %v297
    %v300 = vmax.f32 %v298, 0.0
    %v301 = vmax.f32 %v299, 0.0
    %302 = vst [vmem:[%s5] sm:$0xff] %v300
    %303 = vst [vmem:[%s5 + $0x8] sm:$0xff] %v301
    // Predicated region
    $region30: #{_srgcn_forward_impl.1} parent=1 // pred_check
      _
    $region31: #{_srgcn_forward_impl.1} parent=1 // pred_check_branch
      %305 = sbr.rel (0) target = $region33
    $region32: #{_srgcn_forward_impl.1} parent=1 // pred_region
      _
    $region33: #{_srgcn_forward_impl.1} parent=1 // pred_fallthru
      _
    // Predicated region
    $region34: #{_srgcn_forward_impl.1} parent=1 // pred_check
      _
    $region35: #{_srgcn_forward_impl.1} parent=1 // pred_check_branch
      %307 = sbr.rel (0) target = $region37
    $region36: #{_srgcn_forward_impl.1} parent=1 // pred_region
      _
    $region37: #{_srgcn_forward_impl.1} parent=1 // pred_fallthru
      _
    %308 = vsyncpa [#allocation3], 1
    %309 = vsyncpa [#allocation5], 1

</llo_original>
